<compile_context>
chip_gen: v7x
topology: tpu7x:2x2x1
jax: 0.10.0
libtpu: 0.0.40
codegen_flags: <defaults>
</compile_context>

<pallas_src>
import functools

import jax
import jax.numpy as jnp
from jax.experimental import pallas as pl
from jax.experimental.pallas import tpu as pltpu


# --------------------------------------------------------------------------- #
# Kernel
# --------------------------------------------------------------------------- #
def _make_eluf_kernel(alpha: float, compute_dtype):
    """Builds an elementwise ELUF kernel specialized on alpha and compute dtype."""
    alpha = float(alpha)

    def kernel(x_ref, o_ref):
        x = x_ref[...].astype(compute_dtype)          # no-op cast for native dtype
        neg_x = -x
        # Matches the module's exact formula (exp(-x) - 1); exp lowers to the EUP.
        elu_neg = jnp.exp(neg_x) - jnp.asarray(1.0, compute_dtype)
        if alpha != 1.0:                               # folded away for alpha == 1
            elu_neg = elu_neg * jnp.asarray(alpha, compute_dtype)
        zero = jnp.asarray(0.0, compute_dtype)
        out = jnp.minimum(zero, elu_neg) + jnp.maximum(zero, neg_x)
        o_ref[...] = out.astype(o_ref.dtype)

    return kernel


# --------------------------------------------------------------------------- #
# Chip-aware configuration
# --------------------------------------------------------------------------- #
@functools.lru_cache(maxsize=1)
def _chip_config():
    """(tensorcores_per_chip, target_tile_bytes, vmem_limit_bytes, has_bf16_vpu)."""
    kind = ""
    try:
        kind = jax.devices()[0].device_kind.lower()
    except Exception:
        pass
    vmem_bytes = None
    try:
        vmem_bytes = int(pltpu.get_tpu_info().vmem_capacity_bytes)
    except Exception:
        pass

    # v5e / v6e: single TensorCore per chip.  v4/v5p/v7x (and unknown): assume 2.
    single_core = ("v5e" in kind) or ("v5 lite" in kind) or ("v6" in kind)
    # 128 MiB VMEM generations get bigger tiles; v7x (64 MiB/TC) / unknown stay capped.
    big_vmem = (vmem_bytes is not None and vmem_bytes >= 96 * 1024 * 1024) or any(
        t in kind for t in ("v4", "v5", "v6")
    )
    # bf16 VPU/EUP exists on v6e/v7x; keep f32 compute on older generations.
    has_bf16_vpu = not any(t in kind for t in ("v2", "v3", "v4", "v5"))

    if big_vmem:
        target_tile_bytes = 8 * 1024 * 1024
        vmem_limit_bytes = 64 * 1024 * 1024
    else:
        target_tile_bytes = 4 * 1024 * 1024
        vmem_limit_bytes = 32 * 1024 * 1024

    return (1 if single_core else 2), target_tile_bytes, vmem_limit_bytes, has_bf16_vpu


def _pick_lanes(shape, n):
    """Lane-dense last dim for the (rows, lanes) slab.

    Prefer a suffix product of the native minor dims that is already a multiple
    of 128 so the reshape is a bitcast, not a relayout copy; otherwise fall back
    to the widest power-of-two lane count that divides the element count.
    """
    suffix = 1
    for d in reversed(shape):
        suffix *= int(d)
        if suffix % 128 == 0 and suffix <= 16384:
            return suffix
    for cand in (1024, 512, 256, 128):
        if n % cand == 0:
            return cand
    return 128


def _eluf_plain(x, alpha):
    """Plain-jnp fallback for tiny tails / sub-128-element inputs."""
    xf = x.astype(jnp.float32)
    out = jnp.minimum(0.0, alpha * (jnp.exp(-xf) - 1.0)) + jnp.maximum(0.0, -xf)
    return out.astype(x.dtype)


# --------------------------------------------------------------------------- #
# Forward wrapper
# --------------------------------------------------------------------------- #
def eluf_forward(x: jax.Array, alpha: float = 1.0, *, donate_input: bool = False) -> jax.Array:
    """ELUF.forward: min(0, alpha*(exp(-x)-1)) + max(0, -x), elementwise."""
    alpha = float(alpha)
    orig_shape = x.shape
    dtype = x.dtype
    itemsize = jnp.dtype(dtype).itemsize
    n = x.size
    if n == 0:
        return x

    num_tc, target_tile_bytes, vmem_limit_bytes, has_bf16_vpu = _chip_config()
    compute_dtype = dtype if (dtype == jnp.bfloat16 and has_bf16_vpu) else jnp.float32

    lanes = _pick_lanes(orig_shape, n)
    n_main = (n // lanes) * lanes
    if n_main == 0:
        # Fewer than one 128-wide lane row: not worth a kernel launch.
        return _eluf_plain(x, alpha)

    flat = x.reshape(-1)
    main = flat if n_main == n else flat[:n_main]
    rows = n_main // lanes
    slab = main.reshape(rows, lanes)

    sublane = max(8, 32 // itemsize)                       # 8 (f32), 16 (bf16), 32 (8-bit)
    row_bytes = lanes * itemsize
    tile_rows_cap = max(sublane, (target_tile_bytes // row_bytes) // sublane * sublane)

    if num_tc <= 1:
        # Single TensorCore: one grid step if it fits, otherwise roofline-sized tiles.
        row_tile = rows if rows <= tile_rows_cap else tile_rows_cap
    else:
        # Two TensorCores: an EVEN number of near-equal steps for load balance.
        if rows < 2 * sublane:
            row_tile = rows                                # too small to split
        else:
            steps = max(2, 2 * max(1, round(rows / (2 * tile_rows_cap))))
            row_tile = pl.cdiv(pl.cdiv(rows, steps), sublane) * sublane

    grid = (pl.cdiv(rows, row_tile),)

    cost = pl.CostEstimate(
        flops=6 * n_main,
        transcendentals=n_main,
        bytes_accessed=2 * n_main * itemsize,
    )

    out_slab = pl.pallas_call(
        _make_eluf_kernel(alpha, compute_dtype),
        out_shape=jax.ShapeDtypeStruct((rows, lanes), dtype),
        grid=grid,
        in_specs=[pl.BlockSpec((row_tile, lanes), lambda i: (i, 0))],
        out_specs=pl.BlockSpec((row_tile, lanes), lambda i: (i, 0)),
        compiler_params=pltpu.CompilerParams(
            dimension_semantics=("parallel",),
            vmem_limit_bytes=vmem_limit_bytes,
        ),
        cost_estimate=cost,
        input_output_aliases={0: 0} if donate_input else {},
    )(slab)

    if n_main == n:
        return out_slab.reshape(orig_shape)

    # Sub-128-element tail: plain jnp (tiny; avoids pad + full-output-slice copies).
    tail_out = _eluf_plain(flat[n_main:], alpha)
    return jnp.concatenate([out_slab.reshape(-1), tail_out]).reshape(orig_shape)


# --- Plain-JAX glue mirroring the rest of the module (not the hot path) ----- #
def eluf_inv(y: jax.Array, alpha: float = 1.0, eps: float = 1e-12) -> jax.Array:
    return jnp.minimum(0.0, -y) + jnp.maximum(0.0, -jnp.log(y / alpha + 1.0 + eps))


def eluf_log_abs_det_jacobian(y: jax.Array) -> jax.Array:
    return jnp.minimum(0.0, -y)


if __name__ == "__main__":
    key = jax.random.PRNGKey(0)
    # Small NCHW-shaped input consistent with typical usage of the transform.
    x = jax.random.normal(key, (2, 4, 16, 16), dtype=jnp.float32)

    out = jax.block_until_ready(eluf_forward(x, alpha=1.0))

    # Reference semantics of ELUF.forward (torch -> jnp):
    ref = jnp.minimum(0.0, 1.0 * (jnp.exp(-x) - 1.0)) + jnp.maximum(0.0, -x)
    assert out.shape == x.shape and out.dtype == x.dtype
    assert jnp.allclose(out, ref, rtol=1e-6, atol=1e-6)

    print("KERNEL_OK")
</pallas_src>

<mosaic_0001>
module attributes {stable_mosaic.version = 11 : i64} {
  func.func @kernel(%arg0: i32, %arg1: memref<8x256xf32, #tpu.memory_space<vmem>>, %arg2: memref<8x256xf32, #tpu.memory_space<vmem>>) attributes {dimension_semantics = [#tpu.dimension_semantics<parallel>], iteration_bounds = array<i64: 1>, scalar_prefetch = 0 : i64, scratch_operands = 0 : i64, tpu.core_type = #tpu.core_type<tc>, window_params = [{transform_indices = @transform_0, window_bounds = array<i64: 8, 256>}, {transform_indices = @transform_1, window_bounds = array<i64: 8, 256>}]} {
    %c0 = arith.constant 0 : index
    %c0_0 = arith.constant 0 : index
    %0 = vector.load %arg1[%c0, %c0_0] : memref<8x256xf32, #tpu.memory_space<vmem>>, vector<8x256xf32>
    %cst = arith.constant 0.000000e+00 : f32
    %1 = vector.broadcast %cst : f32 to vector<8x256xf32>
    %2 = arith.subf %1, %0 : vector<8x256xf32>
    %3 = math.exp %2 : vector<8x256xf32>
    %cst_1 = arith.constant 1.000000e+00 : f32
    %4 = vector.broadcast %cst_1 : f32 to vector<8x256xf32>
    %5 = arith.subf %3, %4 : vector<8x256xf32>
    %cst_2 = arith.constant 0.000000e+00 : f32
    %6 = vector.broadcast %cst_2 : f32 to vector<8x256xf32>
    %7 = arith.minimumf %6, %5 : vector<8x256xf32>
    %cst_3 = arith.constant 0.000000e+00 : f32
    %8 = vector.broadcast %cst_3 : f32 to vector<8x256xf32>
    %9 = arith.maximumf %8, %2 : vector<8x256xf32>
    %10 = arith.addf %7, %9 : vector<8x256xf32>
    %c0_4 = arith.constant 0 : index
    %c0_5 = arith.constant 0 : index
    %11 = vector.load %arg2[%c0_4, %c0_5] : memref<8x256xf32, #tpu.memory_space<vmem>>, vector<8x256xf32>
    tpu.vector_store %arg2[%c0_4, %c0_5], %10 {strides = array<i32>} : memref<8x256xf32, #tpu.memory_space<vmem>>, vector<8x256xf32>,
    return
  }
  func.func @transform_0(%arg0: i32) -> (i32, i32) {
    %c0_i32 = arith.constant 0 : i32
    %c0_i32_0 = arith.constant 0 : i32
    return %arg0, %c0_i32 : i32, i32
  }
  func.func @transform_1(%arg0: i32) -> (i32, i32) {
    %c0_i32 = arith.constant 0 : i32
    %c0_i32_0 = arith.constant 0 : i32
    return %arg0, %c0_i32 : i32, i32
  }
}

</mosaic_0001>

<llo_original>
// kernel: tpu_custom_call.1
$region0: #{tpu_custom_call.1}
  #allocation0 [shape = 'u32[]', space=smem, size = 0x4, offset = 0x4, fixed_abs, tag = 'smem constant byte address 0x4 - core index']
  #allocation1 [shape = 'u32[144,128]{1,0:T(1,128)}', space=vmem, size = 0x12000, scoped, tag = 'internal scratch']
  %s0 = inlined_call_operand.hbm [shape: f32[8,256], index: 0, kind: input, shape index: {}]
  %s1 = inlined_call_operand.hbm [shape: f32[8,256], index: 1, kind: output, shape index: {}]
  %s2 = sld [smem:[#allocation0]]
  $region18: #{tpu_custom_call.1} parent=0
    _
  %s4 = ssub.s32 1, %s2
  %s5 = scalar_select 0, %s4, %s2
  $region1: #{tpu_custom_call.1} parent=0
    #allocation2 [shape = 'u8[8192]{0}', space=vmem, size = 0x2000, scoped, tag = 'input window, operand 0, single buffered']
    #allocation3 [shape = 's32[1]{0}', space=sflag, size = 0x4, scoped, tag = 'scoped memory for tpu_custom_call.1']
    #allocation4 [shape = 's32[1]{0}', space=sflag, size = 0x4, scoped, tag = 'scoped memory for tpu_custom_call.1']
    #allocation5 [shape = 'u8[8192]{0}', space=vmem, size = 0x2000, scoped, tag = 'output window, operand 0, single buffered']
    %6 = vsyncpa [#allocation3], 0
    %7 = vsyncpa [#allocation4], 0
    // Predicated region
    $region2: #{tpu_custom_call.1} parent=1 // pred_check
      _
    $region3: #{tpu_custom_call.1} parent=1 // pred_check_branch
      %9 = sbr.rel (0) target = $region5
    $region4: #{tpu_custom_call.1} parent=1 // pred_region
      %s11 = ssub.s32 256, 256
      %12 = vsyncadd [#allocation3], %s11
      %s14 = sshll.u32 [#allocation2], 4
      %s15 = int_to_ptr.vmem [resolvable:$true] %s14
      %17 = dma.hbm_to_vmem [thread:$0]  %s0, 256, %s15, [#allocation3]
    $region5: #{tpu_custom_call.1} parent=1 // pred_fallthru
      _
    // Predicated region
    $region6: #{tpu_custom_call.1} parent=1 // pred_check
      _
    $region7: #{tpu_custom_call.1} parent=1 // pred_check_branch
      %19 = sbr.rel (0) target = $region9
    $region8: #{tpu_custom_call.1} parent=1 // pred_region
      %20 = dma.done [#allocation3], 256
    $region9: #{tpu_custom_call.1} parent=1 // pred_fallthru
      _
    %v21 = vld [vmem:[#allocation2] sm:$0xff]
    %v22 = vld [vmem:[#allocation2 + $0x8] sm:$0xff]
    %v23 = vsub.f32 0.0, %v21
    %v24 = vsub.f32 0.0, %v22
    %v25 = vmul.f32 %v23, 1.442695
    %v26 = vpow.pop %v25
    %v27 = vmul.f32 %v24, 1.442695
    %v28 = vpow.pop %v27
    %v29 = vsub.f32 %v26, 1.0
    %v30 = vsub.f32 %v28, 1.0
    %v31 = vmin.f32 %v29, 0.0
    %v32 = vmin.f32 %v30, 0.0
    %v33 = vmax.f32 %v23, 0.0
    %v34 = vmax.f32 %v24, 0.0
    %v35 = vadd.f32 %v31, %v33
    %v36 = vadd.f32 %v32, %v34
    %37 = vst [vmem:[#allocation5] sm:$0xff] %v35
    %38 = vst [vmem:[#allocation5 + $0x8] sm:$0xff] %v36
    // Predicated region
    $region10: #{tpu_custom_call.1} parent=1 // pred_check
      _
    $region11: #{tpu_custom_call.1} parent=1 // pred_check_branch
      %40 = sbr.rel (0) target = $region13
    $region12: #{tpu_custom_call.1} parent=1 // pred_region
      %s42 = ssub.s32 256, 256
      %43 = vsyncadd [#allocation4], %s42
      %s45 = sshll.u32 [#allocation5], 4
      %s46 = int_to_ptr.vmem [resolvable:$true] %s45
      %48 = dma.vmem_to_hbm [thread:$0]  %s46, 256, %s1, [#allocation4]
    $region13: #{tpu_custom_call.1} parent=1 // pred_fallthru
      _
    // Predicated region
    $region14: #{tpu_custom_call.1} parent=1 // pred_check
      _
    $region15: #{tpu_custom_call.1} parent=1 // pred_check_branch
      %50 = sbr.rel (0) target = $region17
    $region16: #{tpu_custom_call.1} parent=1 // pred_region
      %51 = dma.done [#allocation4], 256
    $region17: #{tpu_custom_call.1} parent=1 // pred_fallthru
      _
    %52 = vsyncpa [#allocation3], 1
    %53 = vsyncpa [#allocation4], 1

</llo_original>
